<compile_context>
chip_gen: v6e
topology: v6e:2x2x1
jax: 0.10.0
libtpu: 0.0.40
codegen_flags: <defaults>
</compile_context>

<pallas_src>
import jax
import jax.numpy as jnp
from jax import lax
from jax.experimental import pallas as pl
from jax.experimental.pallas import tpu as pltpu


def _round_up(x, m):
    return ((x + m - 1) // m) * m


def _make_actor_kernel(action_dim, num_shot):
    """Kernel closure over the (static) action / shot head widths."""
    A = int(action_dim)
    NS = int(num_shot)

    def kernel(s_ref, w1_ref, b1_ref, w2_ref, b2_ref, wh_ref, bh_ref, out_ref):
        # Layer 1: relu(s @ W1 + b1)          (f32 MXU accumulation)
        h1 = jnp.dot(s_ref[...], w1_ref[...],
                     preferred_element_type=jnp.float32) + b1_ref[...]
        h1 = jnp.maximum(h1, 0.0)

        # Layer 2: relu(h1 @ W2 + b2)
        h2 = jnp.dot(h1, w2_ref[...],
                     preferred_element_type=jnp.float32) + b2_ref[...]
        h2 = jnp.maximum(h2, 0.0)

        # Fused heads: one (tb, 128) matmul.
        #   lanes [0, A)        -> action logits
        #   lanes [A, A+NS)     -> shot logits
        #   lanes [A+NS, 128)   -> zero padding (sliced off in the wrapper)
        z = jnp.dot(h2, wh_ref[...],
                    preferred_element_type=jnp.float32) + bh_ref[...]

        lane = lax.broadcasted_iota(jnp.int32, z.shape, 1)
        is_act = lane < A
        is_shot = jnp.logical_and(lane >= A, lane < A + NS)

        # Masked softmax over the NS real shot lanes only.
        logits = jnp.where(is_shot, z, jnp.float32(-1e30))
        m = jnp.max(logits, axis=-1, keepdims=True)          # XLU lane reduce
        e = jnp.exp(logits - m)                               # EUP; pad lanes -> 0
        denom = jnp.sum(e, axis=-1, keepdims=True)
        p = e * pl.reciprocal(denom, approx=True)             # EUP approx rcp

        shot_t = jnp.tanh(p)      # exactly 0 on non-shot lanes (tanh(0) = 0)
        act_t = jnp.tanh(z)
        # Single lane-dense (tb, 128) store.
        out_ref[...] = jnp.where(is_act, act_t, shot_t)

    return kernel


def _choose_batch_tile(B):
    """Rows per grid step: multiple of 8, capped at 2048; for large B use at
    least 2 steps so the 'parallel' grid axis can be sharded across v7x's two
    TensorCores."""
    if B <= 512:
        return _round_up(B, 8)
    n_tiles = max(2, -(-B // 2048))
    return _round_up(-(-B // n_tiles), 8)


def actor_forward(s, params, *, batch_tile=None):
    """Actor forward pass with a single fused Pallas kernel.

    s: (B, state_dim) float32
    params: (w1, b1, w2, b2, w3, b3, w_shot, b_shot); weights stored as
            (in_features, out_features), biases as (1, out_features).
    returns (shot, a): shapes (B, 11), (B, action_dim)
    """
    w1, b1, w2, b2, w3, b3, ws, bs = params
    s = s.astype(jnp.float32)
    B, S = s.shape
    H = w1.shape[1]
    A = w3.shape[1]
    NS = ws.shape[1]                       # 11
    NOUT = _round_up(max(A + NS, 128), 128)  # lane-dense combined head width

    # Everything stays f32 (weights are VMEM-resident; bf16 would only add
    # per-tile cast work).
    f32 = jnp.float32
    w1, w2 = w1.astype(f32), w2.astype(f32)
    b1 = b1.reshape(1, H).astype(f32)
    b2 = b2.reshape(1, H).astype(f32)

    # Fuse the two head weights into one lane-dense (H, NOUT) matrix.
    wh = jnp.zeros((H, NOUT), f32)
    wh = wh.at[:, :A].set(w3.astype(f32)).at[:, A:A + NS].set(ws.astype(f32))
    bh = jnp.zeros((1, NOUT), f32)
    bh = bh.at[:, :A].set(b3.reshape(1, A).astype(f32))
    bh = bh.at[:, A:A + NS].set(bs.reshape(1, NS).astype(f32))

    tb = (_choose_batch_tile(B) if batch_tile is None
          else _round_up(int(batch_tile), 8))
    grid = (pl.cdiv(B, tb),)   # no wrapper-side pad; Pallas masks ragged block

    resident = lambda shape: pl.BlockSpec(shape, lambda i: (0, 0))

    out = pl.pallas_call(
        _make_actor_kernel(A, NS),
        out_shape=jax.ShapeDtypeStruct((B, NOUT), jnp.float32),
        grid_spec=pltpu.PrefetchScalarGridSpec(
            num_scalar_prefetch=0,
            grid=grid,
            in_specs=[
                pl.BlockSpec((tb, S), lambda i: (i, 0)),   # streamed s tile
                resident((S, H)), resident((1, H)),        # W1, b1 (resident)
                resident((H, H)), resident((1, H)),        # W2, b2 (resident)
                resident((H, NOUT)), resident((1, NOUT)),  # fused head W, b
            ],
            out_specs=pl.BlockSpec((tb, NOUT), lambda i: (i, 0)),
        ),
        compiler_params=pltpu.CompilerParams(
            dimension_semantics=("parallel",)),
    )(s, w1, b1, w2, b2, wh, bh)

    a = out[:, :A]
    shot = out[:, A:A + NS]
    return shot, a


def init_actor_params(key, state_dim, action_dim, hidden_width):
    """nn.Linear-style init: uniform(-1/sqrt(fan_in), 1/sqrt(fan_in)).
    Weights stored as (in_features, out_features) (transposed vs PyTorch)."""
    k = jax.random.split(key, 8)

    def lin(kw, kb, fan_in, fan_out):
        bound = 1.0 / jnp.sqrt(jnp.float32(fan_in))
        w = jax.random.uniform(kw, (fan_in, fan_out), jnp.float32, -bound, bound)
        b = jax.random.uniform(kb, (1, fan_out), jnp.float32, -bound, bound)
        return w, b

    w1, b1 = lin(k[0], k[1], state_dim, hidden_width)
    w2, b2 = lin(k[2], k[3], hidden_width, hidden_width)
    w3, b3 = lin(k[4], k[5], hidden_width, action_dim)
    ws, bs = lin(k[6], k[7], hidden_width, 11)
    return (w1, b1, w2, b2, w3, b3, ws, bs)


def actor_reference(s, params):
    """Pure-JAX reference mirroring the PyTorch Actor.forward."""
    w1, b1, w2, b2, w3, b3, ws, bs = params
    h1 = jnp.maximum(s @ w1 + b1, 0.0)
    h2 = jnp.maximum(h1 @ w2 + b2, 0.0)
    a = jnp.tanh(h2 @ w3 + b3)
    shot = jnp.tanh(jax.nn.softmax(h2 @ ws + bs, axis=-1))
    return shot, a


if __name__ == "__main__":
    # Small shapes consistent with the module.
    state_dim, action_dim, hidden_width = 8, 5, 32

    key = jax.random.PRNGKey(0)
    k_p, k_s = jax.random.split(key)
    params = init_actor_params(k_p, state_dim, action_dim, hidden_width)

    fwd = jax.jit(actor_forward)

    # batch=8  : single aligned tile
    # batch=20 : ragged tile (Pallas masks the boundary rows, no wrapper pad)
    # batch=600: two grid steps (megacore-shardable) with a ragged last block
    for batch in (8, 20, 600):
        sk = jax.random.fold_in(k_s, batch)
        s = jax.random.normal(sk, (batch, state_dim), jnp.float32)

        shot, a = jax.block_until_ready(fwd(s, params))
        shot_ref, a_ref = actor_reference(s, params)

        assert shot.shape == (batch, 11) and a.shape == (batch, action_dim)
        assert jnp.allclose(a, a_ref, atol=1e-5, rtol=1e-5), \
            f"action head mismatch (batch={batch})"
        # shot tolerance allows the EUP approximate-reciprocal softmax norm.
        assert jnp.allclose(shot, shot_ref, atol=2e-3, rtol=2e-3), \
            f"shot head mismatch (batch={batch})"

    print("KERNEL_OK")
</pallas_src>

<mosaic_0001>
module attributes {stable_mosaic.version = 11 : i64} {
  func.func @kernel(%arg0: i32, %arg1: memref<8x8xf32, #tpu.memory_space<vmem>>, %arg2: memref<8x32xf32, #tpu.memory_space<vmem>>, %arg3: memref<1x32xf32, #tpu.memory_space<vmem>>, %arg4: memref<32x32xf32, #tpu.memory_space<vmem>>, %arg5: memref<1x32xf32, #tpu.memory_space<vmem>>, %arg6: memref<32x128xf32, #tpu.memory_space<vmem>>, %arg7: memref<1x128xf32, #tpu.memory_space<vmem>>, %arg8: memref<8x128xf32, #tpu.memory_space<vmem>>) attributes {dimension_semantics = [#tpu.dimension_semantics<parallel>], iteration_bounds = array<i64: 1>, scalar_prefetch = 0 : i64, scratch_operands = 0 : i64, tpu.core_type = #tpu.core_type<tc>, window_params = [{transform_indices = @transform_0, window_bounds = array<i64: 8, 8>}, {pipeline_mode = #tpu.pipeline_mode<synchronous>, transform_indices = @transform_1, window_bounds = array<i64: 8, 32>}, {pipeline_mode = #tpu.pipeline_mode<synchronous>, transform_indices = @transform_2, window_bounds = array<i64: 1, 32>}, {pipeline_mode = #tpu.pipeline_mode<synchronous>, transform_indices = @transform_3, window_bounds = array<i64: 32, 32>}, {pipeline_mode = #tpu.pipeline_mode<synchronous>, transform_indices = @transform_4, window_bounds = array<i64: 1, 32>}, {pipeline_mode = #tpu.pipeline_mode<synchronous>, transform_indices = @transform_5, window_bounds = array<i64: 32, 128>}, {pipeline_mode = #tpu.pipeline_mode<synchronous>, transform_indices = @transform_6, window_bounds = array<i64: 1, 128>}, {transform_indices = @transform_7, window_bounds = array<i64: 8, 128>}]} {
    %c0 = arith.constant 0 : index
    %c0_0 = arith.constant 0 : index
    %0 = vector.load %arg1[%c0, %c0_0] : memref<8x8xf32, #tpu.memory_space<vmem>>, vector<8x8xf32>
    %c0_1 = arith.constant 0 : index
    %c0_2 = arith.constant 0 : index
    %1 = vector.load %arg2[%c0_1, %c0_2] : memref<8x32xf32, #tpu.memory_space<vmem>>, vector<8x32xf32>
    %cst = arith.constant dense<0.000000e+00> : vector<8x32xf32>
    %2 = tpu.matmul %0, %1, %cst {dimension_numbers = #tpu.dot_dimension_numbers<[1], [0], [0], [1], [0, 0, 1, 1], [], []>} : vector<8x8xf32>, vector<8x32xf32>, vector<8x32xf32> -> vector<8x32xf32>
    %c0_3 = arith.constant 0 : index
    %c0_4 = arith.constant 0 : index
    %3 = vector.load %arg3[%c0_3, %c0_4] : memref<1x32xf32, #tpu.memory_space<vmem>>, vector<1x32xf32>
    %4 = vector.broadcast %3 : vector<1x32xf32> to vector<8x32xf32>
    %5 = arith.addf %2, %4 : vector<8x32xf32>
    %cst_5 = arith.constant 0.000000e+00 : f32
    %6 = vector.broadcast %cst_5 : f32 to vector<8x32xf32>
    %7 = arith.maximumf %5, %6 : vector<8x32xf32>
    %c0_6 = arith.constant 0 : index
    %c0_7 = arith.constant 0 : index
    %8 = vector.load %arg4[%c0_6, %c0_7] : memref<32x32xf32, #tpu.memory_space<vmem>>, vector<32x32xf32>
    %cst_8 = arith.constant dense<0.000000e+00> : vector<8x32xf32>
    %9 = tpu.matmul %7, %8, %cst_8 {dimension_numbers = #tpu.dot_dimension_numbers<[1], [0], [0], [1], [0, 0, 1, 1], [], []>} : vector<8x32xf32>, vector<32x32xf32>, vector<8x32xf32> -> vector<8x32xf32>
    %c0_9 = arith.constant 0 : index
    %c0_10 = arith.constant 0 : index
    %10 = vector.load %arg5[%c0_9, %c0_10] : memref<1x32xf32, #tpu.memory_space<vmem>>, vector<1x32xf32>
    %11 = vector.broadcast %10 : vector<1x32xf32> to vector<8x32xf32>
    %12 = arith.addf %9, %11 : vector<8x32xf32>
    %cst_11 = arith.constant 0.000000e+00 : f32
    %13 = vector.broadcast %cst_11 : f32 to vector<8x32xf32>
    %14 = arith.maximumf %12, %13 : vector<8x32xf32>
    %c0_12 = arith.constant 0 : index
    %c0_13 = arith.constant 0 : index
    %15 = vector.load %arg6[%c0_12, %c0_13] : memref<32x128xf32, #tpu.memory_space<vmem>>, vector<32x128xf32>
    %cst_14 = arith.constant dense<0.000000e+00> : vector<8x128xf32>
    %16 = tpu.matmul %14, %15, %cst_14 {dimension_numbers = #tpu.dot_dimension_numbers<[1], [0], [0], [1], [0, 0, 1, 1], [], []>} : vector<8x32xf32>, vector<32x128xf32>, vector<8x128xf32> -> vector<8x128xf32>
    %c0_15 = arith.constant 0 : index
    %c0_16 = arith.constant 0 : index
    %17 = vector.load %arg7[%c0_15, %c0_16] : memref<1x128xf32, #tpu.memory_space<vmem>>, vector<1x128xf32>
    %18 = vector.broadcast %17 : vector<1x128xf32> to vector<8x128xf32>
    %19 = arith.addf %16, %18 : vector<8x128xf32>
    %20 = tpu.iota {dimensions = array<i32: 1>} : vector<8x128xi32>
    %c5_i32 = arith.constant 5 : i32
    %21 = vector.broadcast %c5_i32 : i32 to vector<8x128xi32>
    %22 = arith.cmpi slt, %20, %21 : vector<8x128xi32>
    %c5_i32_17 = arith.constant 5 : i32
    %23 = vector.broadcast %c5_i32_17 : i32 to vector<8x128xi32>
    %24 = arith.cmpi sge, %20, %23 : vector<8x128xi32>
    %c16_i32 = arith.constant 16 : i32
    %25 = vector.broadcast %c16_i32 : i32 to vector<8x128xi32>
    %26 = arith.cmpi slt, %20, %25 : vector<8x128xi32>
    %27 = arith.andi %24, %26 : vector<8x128xi1>
    %cst_18 = arith.constant -1.000000e+30 : f32
    %28 = vector.broadcast %cst_18 : f32 to vector<8x128xf32>
    %29 = arith.select %27, %19, %28 : vector<8x128xi1>, vector<8x128xf32>
    %cst_19 = arith.constant dense<0xFF800000> : vector<8xf32>
    %30 = vector.multi_reduction <maximumf>, %29, %cst_19 [1] : vector<8x128xf32> to vector<8xf32>
    %31 = vector.shape_cast %30 : vector<8xf32> to vector<8x1xf32>
    %32 = vector.broadcast %31 : vector<8x1xf32> to vector<8x128xf32>
    %33 = arith.subf %29, %32 : vector<8x128xf32>
    %34 = math.exp %33 : vector<8x128xf32>
    %cst_20 = arith.constant dense<0.000000e+00> : vector<8xf32>
    %35 = vector.multi_reduction <add>, %34, %cst_20 [1] : vector<8x128xf32> to vector<8xf32>
    %36 = vector.shape_cast %35 : vector<8xf32> to vector<8x1xf32>
    %37 = tpu.reciprocal %36 {approx = true} : vector<8x1xf32> -> vector<8x1xf32>
    %38 = vector.broadcast %37 : vector<8x1xf32> to vector<8x128xf32>
    %39 = arith.mulf %34, %38 : vector<8x128xf32>
    %40 = math.tanh %39 : vector<8x128xf32>
    %41 = math.tanh %19 : vector<8x128xf32>
    %42 = arith.select %22, %41, %40 : vector<8x128xi1>, vector<8x128xf32>
    %c0_21 = arith.constant 0 : index
    %c0_22 = arith.constant 0 : index
    %43 = vector.load %arg8[%c0_21, %c0_22] : memref<8x128xf32, #tpu.memory_space<vmem>>, vector<8x128xf32>
    tpu.vector_store %arg8[%c0_21, %c0_22], %42 {strides = array<i32>} : memref<8x128xf32, #tpu.memory_space<vmem>>, vector<8x128xf32>,
    return
  }
  func.func @transform_0(%arg0: i32) -> (i32, i32) {
    %c0_i32 = arith.constant 0 : i32
    %c0_i32_0 = arith.constant 0 : i32
    return %arg0, %c0_i32 : i32, i32
  }
  func.func @transform_1(%arg0: i32) -> (i32, i32) {
    %c0_i32 = arith.constant 0 : i32
    %c0_i32_0 = arith.constant 0 : i32
    %c0_i32_1 = arith.constant 0 : i32
    return %c0_i32, %c0_i32_0 : i32, i32
  }
  func.func @transform_2(%arg0: i32) -> (i32, i32) {
    %c0_i32 = arith.constant 0 : i32
    %c0_i32_0 = arith.constant 0 : i32
    %c0_i32_1 = arith.constant 0 : i32
    return %c0_i32, %c0_i32_0 : i32, i32
  }
  func.func @transform_3(%arg0: i32) -> (i32, i32) {
    %c0_i32 = arith.constant 0 : i32
    %c0_i32_0 = arith.constant 0 : i32
    %c0_i32_1 = arith.constant 0 : i32
    return %c0_i32, %c0_i32_0 : i32, i32
  }
  func.func @transform_4(%arg0: i32) -> (i32, i32) {
    %c0_i32 = arith.constant 0 : i32
    %c0_i32_0 = arith.constant 0 : i32
    %c0_i32_1 = arith.constant 0 : i32
    return %c0_i32, %c0_i32_0 : i32, i32
  }
  func.func @transform_5(%arg0: i32) -> (i32, i32) {
    %c0_i32 = arith.constant 0 : i32
    %c0_i32_0 = arith.constant 0 : i32
    %c0_i32_1 = arith.constant 0 : i32
    return %c0_i32, %c0_i32_0 : i32, i32
  }
  func.func @transform_6(%arg0: i32) -> (i32, i32) {
    %c0_i32 = arith.constant 0 : i32
    %c0_i32_0 = arith.constant 0 : i32
    %c0_i32_1 = arith.constant 0 : i32
    return %c0_i32, %c0_i32_0 : i32, i32
  }
  func.func @transform_7(%arg0: i32) -> (i32, i32) {
    %c0_i32 = arith.constant 0 : i32
    %c0_i32_0 = arith.constant 0 : i32
    return %arg0, %c0_i32 : i32, i32
  }
}

</mosaic_0001>

<llo_original>
// kernel: actor_forward.1
$region0: #{actor_forward.1}
  #allocation0 [shape = 'u32[]', space=smem, size = 0x4, offset = 0x4, fixed_abs, tag = 'smem constant byte address 0x4 - core index']
  #allocation1 [shape = 'u32[144,128]{1,0:T(1,128)}', space=vmem, size = 0x12000, scoped, tag = 'internal scratch']
  %s0 = inlined_call_operand.vmem [shape: f32[8,8], index: 0, kind: input, shape index: {}]
  %s1 = inlined_call_operand.vmem [shape: f32[8,32], index: 1, kind: input, shape index: {}]
  %s2 = inlined_call_operand.vmem [shape: f32[1,32], index: 2, kind: input, shape index: {}]
  %s3 = inlined_call_operand.vmem [shape: f32[32,32], index: 3, kind: input, shape index: {}]
  %s4 = inlined_call_operand.vmem [shape: f32[1,32], index: 4, kind: input, shape index: {}]
  %s5 = inlined_call_operand.vmem [shape: f32[32,128], index: 5, kind: input, shape index: {}]
  %s6 = inlined_call_operand.vmem [shape: f32[1,128], index: 6, kind: input, shape index: {}]
  %s7 = inlined_call_operand.vmem [shape: f32[8,128], index: 7, kind: output, shape index: {}]
  %s8 = sld [smem:[#allocation0]]
  $region38: #{actor_forward.1} parent=0
    _
  %s10 = ssub.s32 1, %s8
  %s11 = scalar_select 0, %s10, %s8
  // Predicated region
  $region2: #{actor_forward.1} parent=0 // pred_check
    _
  $region3: #{actor_forward.1} parent=0 // pred_check_branch
    %13 = sbr.rel (0) target = $region5
  $region4: #{actor_forward.1} parent=0 // pred_region
    _
  $region5: #{actor_forward.1} parent=0 // pred_fallthru
    _
  // Predicated region
  $region6: #{actor_forward.1} parent=0 // pred_check
    _
  $region7: #{actor_forward.1} parent=0 // pred_check_branch
    %15 = sbr.rel (0) target = $region9
  $region8: #{actor_forward.1} parent=0 // pred_region
    _
  $region9: #{actor_forward.1} parent=0 // pred_fallthru
    _
  // Predicated region
  $region10: #{actor_forward.1} parent=0 // pred_check
    _
  $region11: #{actor_forward.1} parent=0 // pred_check_branch
    %17 = sbr.rel (0) target = $region13
  $region12: #{actor_forward.1} parent=0 // pred_region
    _
  $region13: #{actor_forward.1} parent=0 // pred_fallthru
    _
  // Predicated region
  $region14: #{actor_forward.1} parent=0 // pred_check
    _
  $region15: #{actor_forward.1} parent=0 // pred_check_branch
    %19 = sbr.rel (0) target = $region17
  $region16: #{actor_forward.1} parent=0 // pred_region
    _
  $region17: #{actor_forward.1} parent=0 // pred_fallthru
    _
  // Predicated region
  $region18: #{actor_forward.1} parent=0 // pred_check
    _
  $region19: #{actor_forward.1} parent=0 // pred_check_branch
    %21 = sbr.rel (0) target = $region21
  $region20: #{actor_forward.1} parent=0 // pred_region
    _
  $region21: #{actor_forward.1} parent=0 // pred_fallthru
    _
  // Predicated region
  $region22: #{actor_forward.1} parent=0 // pred_check
    _
  $region23: #{actor_forward.1} parent=0 // pred_check_branch
    %23 = sbr.rel (0) target = $region25
  $region24: #{actor_forward.1} parent=0 // pred_region
    _
  $region25: #{actor_forward.1} parent=0 // pred_fallthru
    _
  // Predicated region
  $region26: #{actor_forward.1} parent=0 // pred_check
    _
  $region27: #{actor_forward.1} parent=0 // pred_check_branch
    %25 = sbr.rel (0) target = $region29
  $region28: #{actor_forward.1} parent=0 // pred_region
    _
  $region29: #{actor_forward.1} parent=0 // pred_fallthru
    _
  %v26 = vld [vmem:[%s0] sm:$0xff]
  %v27 = vld [vmem:[%s1] sm:$0xff]
  %v28 = vld [vmem:[%s2] sm:$0x1]
  %v30 = vlaneseq
  %v31 = vshrl.u32 %v30, 7
  %v32 = vsub.s32 0, %v31
  %v33 = vrot.slane %v28, %v32
  %vm35 = vcmask 64512
  %v37 = vsel %vm35, %v26, 0
  %39 = vmatprep.subr.mxu0 0.0
  %40 = vmatpush1.msra.mxu0 0.0
  %41 = vmatprep.subr.mxu0 0.0
  %42 = vmatpush1.msra.mxu0 0.0
  %43 = vmatprep.subr.mxu0 0.0
  %44 = vmatpush1.msra.mxu0 0.0
  %45 = vmatprep.subr.mxu0 0.0
  %46 = vmatpush1.msra.mxu0 0.0
  %47 = vmatprep.subr.mxu0 0.0
  %48 = vmatpush1.msra.mxu0 0.0
  %49 = vmatprep.subr.mxu0 0.0
  %50 = vmatpush1.msra.mxu0 0.0
  %51 = vmatprep.subr.mxu0 0.0
  %52 = vmatpush1.msra.mxu0 0.0
  %53 = vmatprep.subr.mxu0 0.0
  %54 = vmatpush1.msra.mxu0 0.0
  %55 = vmatprep.subr.mxu0 0.0
  %56 = vmatpush1.msra.mxu0 0.0
  %57 = vmatprep.subr.mxu0 0.0
  %58 = vmatpush1.msra.mxu0 0.0
  %59 = vmatprep.subr.mxu0 0.0
  %60 = vmatpush1.msra.mxu0 0.0
  %61 = vmatprep.subr.mxu0 0.0
  %62 = vmatpush1.msra.mxu0 0.0
  %63 = vmatprep.subr.mxu0 0.0
  %64 = vmatpush1.msra.mxu0 0.0
  %65 = vmatprep.subr.mxu0 0.0
  %66 = vmatpush1.msra.mxu0 0.0
  %67 = vmatprep.subr.mxu0 0.0
  %68 = vmatpush1.msra.mxu0 0.0
  %69 = vmatprep.subr.mxu0 0.0
  %70 = vmatpush1.msra.mxu0 %v27
  %71 = vmatprep.subr.mxu0 0.0
  %72 = vmatpush2.msra.mxu0 0.0
  %73 = vmatprep.subr.mxu0 0.0
  %74 = vmatpush2.msra.mxu0 0.0
  %75 = vmatprep.subr.mxu0 0.0
  %76 = vmatpush2.msra.mxu0 0.0
  %77 = vmatprep.subr.mxu0 0.0
  %78 = vmatpush2.msra.mxu0 0.0
  %79 = vmatprep.subr.mxu0 0.0
  %80 = vmatpush2.msra.mxu0 0.0
  %81 = vmatprep.subr.mxu0 0.0
  %82 = vmatpush2.msra.mxu0 0.0
  %83 = vmatprep.subr.mxu0 0.0
  %84 = vmatpush2.msra.mxu0 0.0
  %85 = vmatprep.subr.mxu0 0.0
  %86 = vmatpush2.msra.mxu0 0.0
  %87 = vmatprep.subr.mxu0 0.0
  %88 = vmatpush2.msra.mxu0 0.0
  %89 = vmatprep.subr.mxu0 0.0
  %90 = vmatpush2.msra.mxu0 0.0
  %91 = vmatprep.subr.mxu0 0.0
  %92 = vmatpush2.msra.mxu0 0.0
  %93 = vmatprep.subr.mxu0 0.0
  %94 = vmatpush2.msra.mxu0 0.0
  %95 = vmatprep.subr.mxu0 0.0
  %96 = vmatpush2.msra.mxu0 0.0
  %97 = vmatprep.subr.mxu0 0.0
  %98 = vmatpush2.msra.mxu0 0.0
  %99 = vmatprep.subr.mxu0 0.0
  %100 = vmatpush2.msra.mxu0 0.0
  %101 = vmatprep.subr.mxu0 0.0
  %102 = vmatpush2.msra.mxu0 0.0
  %103 = vmatprep.mubr.f32.mxu0 0.0
  %104 = vmatmul.mubr.f32.gmra.mxu0 %v37
  %v105 = vpop.f32.mrf.mxu0
  %v106 = vadd.f32 %v33, %v105
  %v107 = vpop.f32.mrf.mxu0
  %108 = vdwg.mxu0
  %v109 = vmax.f32 %v106, 0.0
  %v110 = vld [vmem:[%s3] sm:$0xff]
  %v111 = vld [vmem:[%s3 + $0x8] sm:$0xff]
  %v112 = vld [vmem:[%s3 + $0x10] sm:$0xff]
  %v113 = vld [vmem:[%s3 + $0x18] sm:$0xff]
  %v114 = vld [vmem:[%s4] sm:$0x1]
  %v116 = vlaneseq
  %v117 = vshrl.u32 %v116, 7
  %v118 = vsub.s32 0, %v117
  %v119 = vrot.slane %v114, %v118
  %vm121 = vcmask 261120
  %v123 = vsel %vm121, %v109, 0
  %125 = vmatprep.subr.mxu0 0.0
  %126 = vmatpush1.msra.mxu0 0.0
  %127 = vmatprep.subr.mxu0 0.0
  %128 = vmatpush1.msra.mxu0 0.0
  %129 = vmatprep.subr.mxu0 0.0
  %130 = vmatpush1.msra.mxu0 0.0
  %131 = vmatprep.subr.mxu0 0.0
  %132 = vmatpush1.msra.mxu0 0.0
  %133 = vmatprep.subr.mxu0 0.0
  %134 = vmatpush1.msra.mxu0 0.0
  %135 = vmatprep.subr.mxu0 0.0
  %136 = vmatpush1.msra.mxu0 0.0
  %137 = vmatprep.subr.mxu0 0.0
  %138 = vmatpush1.msra.mxu0 0.0
  %139 = vmatprep.subr.mxu0 0.0
  %140 = vmatpush1.msra.mxu0 0.0
  %141 = vmatprep.subr.mxu0 0.0
  %142 = vmatpush1.msra.mxu0 0.0
  %143 = vmatprep.subr.mxu0 0.0
  %144 = vmatpush1.msra.mxu0 0.0
  %145 = vmatprep.subr.mxu0 0.0
  %146 = vmatpush1.msra.mxu0 0.0
  %147 = vmatprep.subr.mxu0 0.0
  %148 = vmatpush1.msra.mxu0 0.0
  %149 = vmatprep.subr.mxu0 0.0
  %150 = vmatpush1.msra.mxu0 %v113
  %151 = vmatprep.subr.mxu0 0.0
  %152 = vmatpush1.msra.mxu0 %v112
  %153 = vmatprep.subr.mxu0 0.0
  %154 = vmatpush1.msra.mxu0 %v111
  %155 = vmatprep.subr.mxu0 0.0
  %156 = vmatpush1.msra.mxu0 %v110
  %157 = vmatprep.subr.mxu0 0.0
  %158 = vmatpush2.msra.mxu0 0.0
  %159 = vmatprep.subr.mxu0 0.0
  %160 = vmatpush2.msra.mxu0 0.0
  %161 = vmatprep.subr.mxu0 0.0
  %162 = vmatpush2.msra.mxu0 0.0
  %163 = vmatprep.subr.mxu0 0.0
  %164 = vmatpush2.msra.mxu0 0.0
  %165 = vmatprep.subr.mxu0 0.0
  %166 = vmatpush2.msra.mxu0 0.0
  %167 = vmatprep.subr.mxu0 0.0
  %168 = vmatpush2.msra.mxu0 0.0
  %169 = vmatprep.subr.mxu0 0.0
  %170 = vmatpush2.msra.mxu0 0.0
  %171 = vmatprep.subr.mxu0 0.0
  %172 = vmatpush2.msra.mxu0 0.0
  %173 = vmatprep.subr.mxu0 0.0
  %174 = vmatpush2.msra.mxu0 0.0
  %175 = vmatprep.subr.mxu0 0.0
  %176 = vmatpush2.msra.mxu0 0.0
  %177 = vmatprep.subr.mxu0 0.0
  %178 = vmatpush2.msra.mxu0 0.0
  %179 = vmatprep.subr.mxu0 0.0
  %180 = vmatpush2.msra.mxu0 0.0
  %181 = vmatprep.subr.mxu0 0.0
  %182 = vmatpush2.msra.mxu0 0.0
  %183 = vmatprep.subr.mxu0 0.0
  %184 = vmatpush2.msra.mxu0 0.0
  %185 = vmatprep.subr.mxu0 0.0
  %186 = vmatpush2.msra.mxu0 0.0
  %187 = vmatprep.subr.mxu0 0.0
  %188 = vmatpush2.msra.mxu0 0.0
  %189 = vmatprep.mubr.f32.mxu0 0.0
  %190 = vmatmul.mubr.f32.gmra.mxu0 %v123
  %v191 = vpop.f32.mrf.mxu0
  %v192 = vadd.f32 %v119, %v191
  %v193 = vpop.f32.mrf.mxu0
  %194 = vdwg.mxu0
  %v195 = vmax.f32 %v192, 0.0
  %v196 = vld [vmem:[%s5] sm:$0xff]
  %v197 = vld [vmem:[%s5 + $0x8] sm:$0xff]
  %v198 = vld [vmem:[%s5 + $0x10] sm:$0xff]
  %v199 = vld [vmem:[%s5 + $0x18] sm:$0xff]
  %v200 = vld [vmem:[%s6] sm:$0x1]
  %v202 = vlaneseq
  %v203 = vshrl.u32 %v202, 7
  %v204 = vsub.s32 0, %v203
  %v205 = vrot.slane %v200, %v204
  %v208 = vsel %vm121, %v195, 0
  %210 = vmatprep.subr.mxu0 0.0
  %211 = vmatpush1.msra.mxu0 0.0
  %212 = vmatprep.subr.mxu0 0.0
  %213 = vmatpush1.msra.mxu0 0.0
  %214 = vmatprep.subr.mxu0 0.0
  %215 = vmatpush1.msra.mxu0 0.0
  %216 = vmatprep.subr.mxu0 0.0
  %217 = vmatpush1.msra.mxu0 0.0
  %218 = vmatprep.subr.mxu0 0.0
  %219 = vmatpush1.msra.mxu0 0.0
  %220 = vmatprep.subr.mxu0 0.0
  %221 = vmatpush1.msra.mxu0 0.0
  %222 = vmatprep.subr.mxu0 0.0
  %223 = vmatpush1.msra.mxu0 0.0
  %224 = vmatprep.subr.mxu0 0.0
  %225 = vmatpush1.msra.mxu0 0.0
  %226 = vmatprep.subr.mxu0 0.0
  %227 = vmatpush1.msra.mxu0 0.0
  %228 = vmatprep.subr.mxu0 0.0
  %229 = vmatpush1.msra.mxu0 0.0
  %230 = vmatprep.subr.mxu0 0.0
  %231 = vmatpush1.msra.mxu0 0.0
  %232 = vmatprep.subr.mxu0 0.0
  %233 = vmatpush1.msra.mxu0 0.0
  %234 = vmatprep.subr.mxu0 0.0
  %235 = vmatpush1.msra.mxu0 %v199
  %236 = vmatprep.subr.mxu0 0.0
  %237 = vmatpush1.msra.mxu0 %v198
  %238 = vmatprep.subr.mxu0 0.0
  %239 = vmatpush1.msra.mxu0 %v197
  %240 = vmatprep.subr.mxu0 0.0
  %241 = vmatpush1.msra.mxu0 %v196
  %242 = vmatprep.subr.mxu0 0.0
  %243 = vmatpush2.msra.mxu0 0.0
  %244 = vmatprep.subr.mxu0 0.0
  %245 = vmatpush2.msra.mxu0 0.0
  %246 = vmatprep.subr.mxu0 0.0
  %247 = vmatpush2.msra.mxu0 0.0
  %248 = vmatprep.subr.mxu0 0.0
  %249 = vmatpush2.msra.mxu0 0.0
  %250 = vmatprep.subr.mxu0 0.0
  %251 = vmatpush2.msra.mxu0 0.0
  %252 = vmatprep.subr.mxu0 0.0
  %253 = vmatpush2.msra.mxu0 0.0
  %254 = vmatprep.subr.mxu0 0.0
  %255 = vmatpush2.msra.mxu0 0.0
  %256 = vmatprep.subr.mxu0 0.0
  %257 = vmatpush2.msra.mxu0 0.0
  %258 = vmatprep.subr.mxu0 0.0
  %259 = vmatpush2.msra.mxu0 0.0
  %260 = vmatprep.subr.mxu0 0.0
  %261 = vmatpush2.msra.mxu0 0.0
  %262 = vmatprep.subr.mxu0 0.0
  %263 = vmatpush2.msra.mxu0 0.0
  %264 = vmatprep.subr.mxu0 0.0
  %265 = vmatpush2.msra.mxu0 0.0
  %266 = vmatprep.subr.mxu0 0.0
  %267 = vmatpush2.msra.mxu0 0.0
  %268 = vmatprep.subr.mxu0 0.0
  %269 = vmatpush2.msra.mxu0 0.0
  %270 = vmatprep.subr.mxu0 0.0
  %271 = vmatpush2.msra.mxu0 0.0
  %272 = vmatprep.subr.mxu0 0.0
  %273 = vmatpush2.msra.mxu0 0.0
  %274 = vmatprep.mubr.f32.mxu0 0.0
  %275 = vmatmul.mubr.f32.gmra.mxu0 %v208
  %v276 = vpop.f32.mrf.mxu0
  %v277 = vadd.f32 %v205, %v276
  %v278 = vpop.f32.mrf.mxu0
  %279 = vdwg.mxu0
  %v280 = vlaneseq
  %v281 = vand.u32 %v280, 127
  %vm282 = vcmp.lt.s32.totalorder %v281, 5
  %vm283 = vcmp.ge.s32.totalorder %v281, 5
  %vm284 = vcmp.lt.s32.totalorder %v281, 16
  %vm285 = vmand %vm283, %vm284
  %v286 = vsel %vm285, %v277, -1e+30
  %287 = vmax.xlane.f32.xlu0 %v286
  %v288 = vpop.xlane.xlu0 %287
  %v289 = vsub.f32 %v286, %v288
  %v290 = vmul.f32 %v289, 1.442695
  %v291 = vpow.pop %v290
  %292 = vadd.xlane.f32.xlu0 %v291
  %v293 = vpop.xlane.xlu0 %292
  %v294 = vrcp.pop %v293
  %v295 = vmul.f32 %v291, %v294
  %v296 = vtanh.pop %v295
  %v297 = vtanh.pop %v277
  %v298 = vsel %vm282, %v297, %v296
  %299 = vst [vmem:[%s7] sm:$0xff] %v298
  // Predicated region
  $region30: #{actor_forward.1} parent=0 // pred_check
    _
  $region31: #{actor_forward.1} parent=0 // pred_check_branch
    %301 = sbr.rel (0) target = $region33
  $region32: #{actor_forward.1} parent=0 // pred_region
    _
  $region33: #{actor_forward.1} parent=0 // pred_fallthru
    _
  // Predicated region
  $region34: #{actor_forward.1} parent=0 // pred_check
    _
  $region35: #{actor_forward.1} parent=0 // pred_check_branch
    %303 = sbr.rel (0) target = $region37
  $region36: #{actor_forward.1} parent=0 // pred_region
    _
  $region37: #{actor_forward.1} parent=0 // pred_fallthru
    _

</llo_original>
